<compile_context>
chip_gen: v7x
topology: tpu7x:2x2x1
jax: 0.10.0
libtpu: 0.0.40
codegen_flags: <defaults>
</compile_context>

<pallas_src>
import functools

import jax
import jax.numpy as jnp
from jax import lax
from jax.experimental import pallas as pl
from jax.experimental.pallas import tpu as pltpu

_TARGET_BLOCK_BYTES = 2 * 1024 * 1024   # ~2 MiB input tile -> ~8 MiB VMEM with
                                        # double-buffered in+out (fits v5e/v6e/v7x)


def _uniform_from_index(idx_u32, seed_u32):
    """Counter-based uniform [0, 1) from a 32-bit avalanche hash of (index, seed)."""
    u = lambda v: jnp.uint32(v)
    # Multiplicative seed mix (avoids seed/tile collisions of `seed + index`).
    h = idx_u32 ^ (seed_u32 * u(0x9E3779B1))
    # lowbias32-style finalizer: good avalanche, only VPU int ops.
    h = h ^ (h >> 16)
    h = h * u(0x21F0AAAD)
    h = h ^ (h >> 15)
    h = h * u(0x735A2D97)
    h = h ^ (h >> 15)
    # Top 24 bits -> exactly-representable f32 uniform grid in [0, 1).
    # (Probabilities below 2^-24 are never sampled; acceptable for f32.)
    return (h >> 8).astype(jnp.float32) * jnp.float32(1.0 / (1 << 24))


def _stoch_sign_kernel(seed_ref, x_ref, o_ref, *, tau, block_rows, lane):
    x = x_ref[...]
    p0 = jax.nn.sigmoid(x.astype(jnp.float32) * jnp.float32(tau))

    # Global element index of every lane of this block.  The stream depends only
    # on (seed, global index), so grid iterations are order-independent.
    shape = x.shape
    row = lax.broadcasted_iota(jnp.int32, shape, 0) + pl.program_id(0) * block_rows
    col = lax.broadcasted_iota(jnp.int32, shape, 1)
    idx = row.astype(jnp.uint32) * jnp.uint32(lane) + col.astype(jnp.uint32)

    uni = _uniform_from_index(idx, seed_ref[0].astype(jnp.uint32))

    one = jnp.asarray(1.0, o_ref.dtype)
    neg_one = jnp.asarray(-1.0, o_ref.dtype)
    # Fused Bernoulli + sign: where(u < p0, +1, -1), constants already in out dtype.
    o_ref[...] = jnp.where(uni < p0, one, neg_one)
    # TODO(synk): straight-through gradient (out.detach() + 2*(p0 - p0.detach()))
    # is a backward-pass construct; only the forward value is implemented here.


def _choose_lane(n):
    """Widest lane width (multiple of 128, <= 2048) dividing n; else pad to 128."""
    for w in (2048, 1024, 512, 256, 128):
        if n % w == 0:
            return w, 0
    return 128, (-n) % 128


def _sublane_multiple(dtype):
    bits = jnp.dtype(dtype).itemsize * 8
    return {32: 8, 16: 16, 8: 32}.get(bits, 8)


def stoch_sign(x, *, tau=1.0, seed=0):
    """Applies stochastic sign elementwise. Works for any input shape."""
    orig_shape = x.shape
    dtype = x.dtype
    flat = x.reshape(-1)
    n = flat.shape[0]

    lane, pad = _choose_lane(n)
    if pad:
        # Only for ragged sizes (n not a multiple of 128): minimal pad.
        flat = jnp.pad(flat, (0, pad))
    rows = flat.shape[0] // lane
    x2d = flat.reshape(rows, lane)

    sub = _sublane_multiple(dtype)
    itemsize = jnp.dtype(dtype).itemsize
    target_rows = max(sub, (_TARGET_BLOCK_BYTES // (lane * itemsize)) // sub * sub)
    if rows <= target_rows:
        block_rows = rows            # full-dim block: always a legal tile
    else:
        block_rows = target_rows     # multiple of the min sublane tile
    grid = pl.cdiv(rows, block_rows)  # ragged last block is masked by Pallas

    seed_arr = jnp.asarray([seed], dtype=jnp.int32)

    out2d = pl.pallas_call(
        functools.partial(_stoch_sign_kernel, tau=float(tau),
                          block_rows=block_rows, lane=lane),
        out_shape=jax.ShapeDtypeStruct((rows, lane), dtype),
        grid_spec=pltpu.PrefetchScalarGridSpec(
            num_scalar_prefetch=1,                       # seed lands in SMEM
            grid=(grid,),
            in_specs=[pl.BlockSpec((block_rows, lane), lambda i, s_ref: (i, 0))],
            out_specs=pl.BlockSpec((block_rows, lane), lambda i, s_ref: (i, 0)),
        ),
        compiler_params=pltpu.CompilerParams(
            # Counter-based PRNG -> tiles are independent; lets v7x's 2 TCs split.
            dimension_semantics=("parallel",),
            # Explicit budget: ~8 MiB needed, leave headroom but stay well under
            # v7x's 64 MiB physical VMEM.
            vmem_limit_bytes=48 * 1024 * 1024,
        ),
    )(seed_arr, x2d)

    out = out2d.reshape(-1)
    if pad:
        out = out[:n]
    return out.reshape(orig_shape)


if __name__ == "__main__":
    key = jax.random.PRNGKey(0)
    # Small NCHW input consistent with the module's "(N, *)" contract.
    x = jax.random.normal(key, (2, 4, 16, 16), dtype=jnp.float32)

    out = stoch_sign(x, tau=1.0, seed=0)
    out = jax.block_until_ready(out)

    # Sanity: output must be exactly +/-1 and same shape/dtype as input.
    assert out.shape == x.shape
    assert out.dtype == x.dtype
    assert bool(jnp.all(jnp.abs(out) == 1.0))

    # Deterministic directional check: sigmoid(50) == 1.0 in f32, and the
    # uniform draw lies in [0, 1), so the sign must be +1 everywhere.
    x_big = jnp.full((2, 4, 16, 16), 50.0, dtype=jnp.float32)
    out_big = jax.block_until_ready(stoch_sign(x_big, tau=1.0, seed=3))
    assert bool(jnp.all(out_big == 1.0))

    print("KERNEL_OK")
</pallas_src>

<mosaic_0001>
module attributes {stable_mosaic.version = 11 : i64} {
  func.func @_stoch_sign_kernel(%arg0: i32, %arg1: memref<1xi32, #tpu.memory_space<smem>>, %arg2: memref<1x2048xf32, #tpu.memory_space<vmem>>, %arg3: memref<1x2048xf32, #tpu.memory_space<vmem>>) attributes {dimension_semantics = [#tpu.dimension_semantics<parallel>], iteration_bounds = array<i64: 1>, scalar_prefetch = 1 : i64, scratch_operands = 0 : i64, tpu.core_type = #tpu.core_type<tc>, window_params = [{transform_indices = @transform_0, window_bounds = array<i64: 1, 2048>}, {transform_indices = @transform_1, window_bounds = array<i64: 1, 2048>}]} {
    %c0 = arith.constant 0 : index
    %c0_0 = arith.constant 0 : index
    %0 = vector.load %arg2[%c0, %c0_0] : memref<1x2048xf32, #tpu.memory_space<vmem>>, vector<1x2048xf32>
    %cst = arith.constant 1.000000e+00 : f32
    %1 = vector.broadcast %cst : f32 to vector<1x2048xf32>
    %2 = arith.mulf %0, %1 : vector<1x2048xf32>
    %3 = arith.negf %2 : vector<1x2048xf32>
    %4 = math.exp %3 : vector<1x2048xf32>
    %cst_1 = arith.constant 1.000000e+00 : f32
    %5 = vector.broadcast %cst_1 : f32 to vector<1x2048xf32>
    %6 = arith.addf %5, %4 : vector<1x2048xf32>
    %7 = arith.divf %5, %6 : vector<1x2048xf32>
    %8 = tpu.iota {dimensions = array<i32: 0>} : vector<1x2048xi32>
    %c1_i32 = arith.constant 1 : i32
    %9 = arith.muli %arg0, %c1_i32 : i32
    %10 = vector.broadcast %9 : i32 to vector<1x2048xi32>
    %11 = arith.addi %8, %10 : vector<1x2048xi32>
    %12 = tpu.iota {dimensions = array<i32: 1>} : vector<1x2048xi32>
    %c2048_i32 = arith.constant 2048 : i32
    %13 = vector.broadcast %c2048_i32 : i32 to vector<1x2048xi32>
    %14 = arith.muli %11, %13 : vector<1x2048xi32>
    %15 = arith.addi %14, %12 : vector<1x2048xi32>
    %c0_2 = arith.constant 0 : index
    %16 = memref.load %arg1[%c0_2] : memref<1xi32, #tpu.memory_space<smem>>
    %c-1640531535_i32 = arith.constant -1640531535 : i32
    %17 = arith.muli %16, %c-1640531535_i32 : i32
    %18 = vector.broadcast %17 : i32 to vector<1x2048xi32>
    %19 = arith.xori %15, %18 : vector<1x2048xi32>
    %c16_i32 = arith.constant 16 : i32
    %20 = vector.broadcast %c16_i32 : i32 to vector<1x2048xi32>
    %21 = arith.shrui %19, %20 : vector<1x2048xi32>
    %22 = arith.xori %19, %21 : vector<1x2048xi32>
    %c569420461_i32 = arith.constant 569420461 : i32
    %23 = vector.broadcast %c569420461_i32 : i32 to vector<1x2048xi32>
    %24 = arith.muli %22, %23 : vector<1x2048xi32>
    %c15_i32 = arith.constant 15 : i32
    %25 = vector.broadcast %c15_i32 : i32 to vector<1x2048xi32>
    %26 = arith.shrui %24, %25 : vector<1x2048xi32>
    %27 = arith.xori %24, %26 : vector<1x2048xi32>
    %c1935289751_i32 = arith.constant 1935289751 : i32
    %28 = vector.broadcast %c1935289751_i32 : i32 to vector<1x2048xi32>
    %29 = arith.muli %27, %28 : vector<1x2048xi32>
    %c15_i32_3 = arith.constant 15 : i32
    %30 = vector.broadcast %c15_i32_3 : i32 to vector<1x2048xi32>
    %31 = arith.shrui %29, %30 : vector<1x2048xi32>
    %32 = arith.xori %29, %31 : vector<1x2048xi32>
    %c8_i32 = arith.constant 8 : i32
    %33 = vector.broadcast %c8_i32 : i32 to vector<1x2048xi32>
    %34 = arith.shrui %32, %33 : vector<1x2048xi32>
    %35 = arith.uitofp %34 : vector<1x2048xi32> to vector<1x2048xf32>
    %cst_4 = arith.constant 5.96046448E-8 : f32
    %36 = vector.broadcast %cst_4 : f32 to vector<1x2048xf32>
    %37 = arith.mulf %35, %36 : vector<1x2048xf32>
    %38 = arith.cmpf olt, %37, %7 : vector<1x2048xf32>
    %cst_5 = arith.constant 1.000000e+00 : f32
    %cst_6 = arith.constant -1.000000e+00 : f32
    %39 = vector.broadcast %cst_5 : f32 to vector<1x2048xf32>
    %40 = vector.broadcast %cst_6 : f32 to vector<1x2048xf32>
    %41 = arith.select %38, %39, %40 : vector<1x2048xi1>, vector<1x2048xf32>
    %c0_7 = arith.constant 0 : index
    %c0_8 = arith.constant 0 : index
    %42 = vector.load %arg3[%c0_7, %c0_8] : memref<1x2048xf32, #tpu.memory_space<vmem>>, vector<1x2048xf32>
    tpu.vector_store %arg3[%c0_7, %c0_8], %41 {strides = array<i32>} : memref<1x2048xf32, #tpu.memory_space<vmem>>, vector<1x2048xf32>,
    return
  }
  func.func @transform_0(%arg0: i32, %arg1: memref<1xi32, #tpu.memory_space<smem>>) -> (i32, i32) {
    %c0_i32 = arith.constant 0 : i32
    %c0_i32_0 = arith.constant 0 : i32
    return %arg0, %c0_i32 : i32, i32
  }
  func.func @transform_1(%arg0: i32, %arg1: memref<1xi32, #tpu.memory_space<smem>>) -> (i32, i32) {
    %c0_i32 = arith.constant 0 : i32
    %c0_i32_0 = arith.constant 0 : i32
    return %arg0, %c0_i32 : i32, i32
  }
}

</mosaic_0001>

<llo_original>
// kernel: tpu_custom_call.1
$region0: #{tpu_custom_call.1}
  #allocation0 [shape = 'u32[]', space=smem, size = 0x4, offset = 0x4, fixed_abs, tag = 'smem constant byte address 0x4 - core index']
  #allocation1 [shape = 'u32[144,128]{1,0:T(1,128)}', space=vmem, size = 0x12000, scoped, tag = 'internal scratch']
  #allocation2 [shape = 's32[1]{0}', space=sflag, size = 0x4, scoped, tag = 'scoped memory for tpu_custom_call.1']
  #allocation3 [shape = 's32[1]{0:T(128)S(6)}', space=smem, size = 0x200, scoped, tag = 'prefetched SMEM operand 0']
  %s0 = inlined_call_operand.<no memory space> [shape: s32[1], index: 0, kind: input, shape index: {}]
  %s1 = inlined_call_operand.hbm [shape: f32[1,2048], index: 1, kind: input, shape index: {}]
  %s2 = inlined_call_operand.hbm [shape: f32[1,2048], index: 2, kind: output, shape index: {}]
  %s3 = sld [smem:[#allocation0]]
  $region18: #{tpu_custom_call.1} parent=0
    _
  %s5 = ssub.s32 1, %s3
  %s6 = scalar_select 0, %s5, %s3
  %7 = sst [smem:[#allocation3]] %s0
  $region1: #{tpu_custom_call.1} parent=0
    #allocation4 [shape = 'u8[8192]{0}', space=vmem, size = 0x2000, scoped, tag = 'input window, operand 1, single buffered']
    #allocation5 [shape = 's32[1]{0}', space=sflag, size = 0x4, scoped, tag = 'scoped memory for tpu_custom_call.1']
    #allocation6 [shape = 's32[1]{0}', space=sflag, size = 0x4, scoped, tag = 'scoped memory for tpu_custom_call.1']
    #allocation7 [shape = 'u8[8192]{0}', space=vmem, size = 0x2000, scoped, tag = 'output window, operand 0, single buffered']
    %8 = vsyncpa [#allocation5], 0
    %9 = vsyncpa [#allocation6], 0
    // Predicated region
    $region2: #{tpu_custom_call.1} parent=1 // pred_check
      _
    $region3: #{tpu_custom_call.1} parent=1 // pred_check_branch
      %11 = sbr.rel (0) target = $region5
    $region4: #{tpu_custom_call.1} parent=1 // pred_region
      %s13 = ssub.s32 256, 256
      %14 = vsyncadd [#allocation5], %s13
      %s16 = sshll.u32 [#allocation4], 4
      %s17 = int_to_ptr.vmem [resolvable:$true] %s16
      %19 = dma.hbm_to_vmem [thread:$0]  %s1, 256, %s17, [#allocation5]
    $region5: #{tpu_custom_call.1} parent=1 // pred_fallthru
      _
    // Predicated region
    $region6: #{tpu_custom_call.1} parent=1 // pred_check
      _
    $region7: #{tpu_custom_call.1} parent=1 // pred_check_branch
      %21 = sbr.rel (0) target = $region9
    $region8: #{tpu_custom_call.1} parent=1 // pred_region
      %22 = dma.done [#allocation5], 256
    $region9: #{tpu_custom_call.1} parent=1 // pred_fallthru
      _
    %v23 = vld [vmem:[#allocation4] sm:$0xff]
    %v24 = vld [vmem:[#allocation4 + $0x8] sm:$0xff]
    %v25 = vxor.u32 %v23, 2147483648
    %v26 = vxor.u32 %v24, 2147483648
    %v27 = vmul.f32 %v25, 1.442695
    %v28 = vpow.pop %v27
    %v29 = vmul.f32 %v26, 1.442695
    %v30 = vpow.pop %v29
    %v31 = vadd.f32 %v28, 1.0
    %v32 = vadd.f32 %v30, 1.0
    %v33 = vrcp.pop %v31
    %v34 = vmul.f32 1.0, %v33
    %v35 = vrcp.pop %v32
    %v36 = vmul.f32 1.0, %v35
    %v37 = vlaneseq
    %v38 = vshrl.u32 %v37, 7
    %v39 = vstv 0
    %v40 = vadd.s32 %v38, %v39
    %v41 = vlaneseq
    %v42 = vand.u32 %v41, 127
    %v43 = vadd.s32 %v42, 128
    %v44 = vadd.s32 %v42, 256
    %v45 = vadd.s32 %v42, 384
    %v46 = vadd.s32 %v42, 512
    %v47 = vadd.s32 %v42, 640
    %v48 = vadd.s32 %v42, 768
    %v49 = vadd.s32 %v42, 896
    %v50 = vadd.s32 %v42, 1024
    %v51 = vadd.s32 %v42, 1152
    %v52 = vadd.s32 %v42, 1280
    %v53 = vadd.s32 %v42, 1408
    %v54 = vadd.s32 %v42, 1536
    %v55 = vadd.s32 %v42, 1664
    %v56 = vadd.s32 %v42, 1792
    %v57 = vadd.s32 %v42, 1920
    %v58 = vmul.u32 %v40, 2048
    %v59 = vadd.s32 %v58, %v42
    %v60 = vadd.s32 %v58, %v43
    %v61 = vadd.s32 %v58, %v44
    %v62 = vadd.s32 %v58, %v45
    %v63 = vadd.s32 %v58, %v46
    %v64 = vadd.s32 %v58, %v47
    %v65 = vadd.s32 %v58, %v48
    %v66 = vadd.s32 %v58, %v49
    %v67 = vadd.s32 %v58, %v50
    %v68 = vadd.s32 %v58, %v51
    %v69 = vadd.s32 %v58, %v52
    %v70 = vadd.s32 %v58, %v53
    %v71 = vadd.s32 %v58, %v54
    %v72 = vadd.s32 %v58, %v55
    %v73 = vadd.s32 %v58, %v56
    %v74 = vadd.s32 %v58, %v57
    %s75 = sld [smem:[#allocation3]]
    %s76 = smul.u32 %s75, 2654435761
    %v77 = vstv %s76
    %v78 = vxor.u32 %v59, %v77
    %v79 = vxor.u32 %v60, %v77
    %v80 = vxor.u32 %v61, %v77
    %v81 = vxor.u32 %v62, %v77
    %v82 = vxor.u32 %v63, %v77
    %v83 = vxor.u32 %v64, %v77
    %v84 = vxor.u32 %v65, %v77
    %v85 = vxor.u32 %v66, %v77
    %v86 = vxor.u32 %v67, %v77
    %v87 = vxor.u32 %v68, %v77
    %v88 = vxor.u32 %v69, %v77
    %v89 = vxor.u32 %v70, %v77
    %v90 = vxor.u32 %v71, %v77
    %v91 = vxor.u32 %v72, %v77
    %v92 = vxor.u32 %v73, %v77
    %v93 = vxor.u32 %v74, %v77
    %v94 = vshrl.u32 %v78, 16
    %v95 = vshrl.u32 %v79, 16
    %v96 = vshrl.u32 %v80, 16
    %v97 = vshrl.u32 %v81, 16
    %v98 = vshrl.u32 %v82, 16
    %v99 = vshrl.u32 %v83, 16
    %v100 = vshrl.u32 %v84, 16
    %v101 = vshrl.u32 %v85, 16
    %v102 = vshrl.u32 %v86, 16
    %v103 = vshrl.u32 %v87, 16
    %v104 = vshrl.u32 %v88, 16
    %v105 = vshrl.u32 %v89, 16
    %v106 = vshrl.u32 %v90, 16
    %v107 = vshrl.u32 %v91, 16
    %v108 = vshrl.u32 %v92, 16
    %v109 = vshrl.u32 %v93, 16
    %v110 = vxor.u32 %v78, %v94
    %v111 = vxor.u32 %v79, %v95
    %v112 = vxor.u32 %v80, %v96
    %v113 = vxor.u32 %v81, %v97
    %v114 = vxor.u32 %v82, %v98
    %v115 = vxor.u32 %v83, %v99
    %v116 = vxor.u32 %v84, %v100
    %v117 = vxor.u32 %v85, %v101
    %v118 = vxor.u32 %v86, %v102
    %v119 = vxor.u32 %v87, %v103
    %v120 = vxor.u32 %v88, %v104
    %v121 = vxor.u32 %v89, %v105
    %v122 = vxor.u32 %v90, %v106
    %v123 = vxor.u32 %v91, %v107
    %v124 = vxor.u32 %v92, %v108
    %v125 = vxor.u32 %v93, %v109
    %v126 = vmul.u32 %v110, 569420461
    %v127 = vmul.u32 %v111, 569420461
    %v128 = vmul.u32 %v112, 569420461
    %v129 = vmul.u32 %v113, 569420461
    %v130 = vmul.u32 %v114, 569420461
    %v131 = vmul.u32 %v115, 569420461
    %v132 = vmul.u32 %v116, 569420461
    %v133 = vmul.u32 %v117, 569420461
    %v134 = vmul.u32 %v118, 569420461
    %v135 = vmul.u32 %v119, 569420461
    %v136 = vmul.u32 %v120, 569420461
    %v137 = vmul.u32 %v121, 569420461
    %v138 = vmul.u32 %v122, 569420461
    %v139 = vmul.u32 %v123, 569420461
    %v140 = vmul.u32 %v124, 569420461
    %v141 = vmul.u32 %v125, 569420461
    %v142 = vshrl.u32 %v126, 15
    %v143 = vshrl.u32 %v127, 15
    %v144 = vshrl.u32 %v128, 15
    %v145 = vshrl.u32 %v129, 15
    %v146 = vshrl.u32 %v130, 15
    %v147 = vshrl.u32 %v131, 15
    %v148 = vshrl.u32 %v132, 15
    %v149 = vshrl.u32 %v133, 15
    %v150 = vshrl.u32 %v134, 15
    %v151 = vshrl.u32 %v135, 15
    %v152 = vshrl.u32 %v136, 15
    %v153 = vshrl.u32 %v137, 15
    %v154 = vshrl.u32 %v138, 15
    %v155 = vshrl.u32 %v139, 15
    %v156 = vshrl.u32 %v140, 15
    %v157 = vshrl.u32 %v141, 15
    %v158 = vxor.u32 %v126, %v142
    %v159 = vxor.u32 %v127, %v143
    %v160 = vxor.u32 %v128, %v144
    %v161 = vxor.u32 %v129, %v145
    %v162 = vxor.u32 %v130, %v146
    %v163 = vxor.u32 %v131, %v147
    %v164 = vxor.u32 %v132, %v148
    %v165 = vxor.u32 %v133, %v149
    %v166 = vxor.u32 %v134, %v150
    %v167 = vxor.u32 %v135, %v151
    %v168 = vxor.u32 %v136, %v152
    %v169 = vxor.u32 %v137, %v153
    %v170 = vxor.u32 %v138, %v154
    %v171 = vxor.u32 %v139, %v155
    %v172 = vxor.u32 %v140, %v156
    %v173 = vxor.u32 %v141, %v157
    %v174 = vmul.u32 %v158, 1935289751
    %v175 = vmul.u32 %v159, 1935289751
    %v176 = vmul.u32 %v160, 1935289751
    %v177 = vmul.u32 %v161, 1935289751
    %v178 = vmul.u32 %v162, 1935289751
    %v179 = vmul.u32 %v163, 1935289751
    %v180 = vmul.u32 %v164, 1935289751
    %v181 = vmul.u32 %v165, 1935289751
    %v182 = vmul.u32 %v166, 1935289751
    %v183 = vmul.u32 %v167, 1935289751
    %v184 = vmul.u32 %v168, 1935289751
    %v185 = vmul.u32 %v169, 1935289751
    %v186 = vmul.u32 %v170, 1935289751
    %v187 = vmul.u32 %v171, 1935289751
    %v188 = vmul.u32 %v172, 1935289751
    %v189 = vmul.u32 %v173, 1935289751
    %v190 = vshrl.u32 %v174, 15
    %v191 = vshrl.u32 %v175, 15
    %v192 = vshrl.u32 %v176, 15
    %v193 = vshrl.u32 %v177, 15
    %v194 = vshrl.u32 %v178, 15
    %v195 = vshrl.u32 %v179, 15
    %v196 = vshrl.u32 %v180, 15
    %v197 = vshrl.u32 %v181, 15
    %v198 = vshrl.u32 %v182, 15
    %v199 = vshrl.u32 %v183, 15
    %v200 = vshrl.u32 %v184, 15
    %v201 = vshrl.u32 %v185, 15
    %v202 = vshrl.u32 %v186, 15
    %v203 = vshrl.u32 %v187, 15
    %v204 = vshrl.u32 %v188, 15
    %v205 = vshrl.u32 %v189, 15
    %v206 = vxor.u32 %v174, %v190
    %v207 = vxor.u32 %v175, %v191
    %v208 = vxor.u32 %v176, %v192
    %v209 = vxor.u32 %v177, %v193
    %v210 = vxor.u32 %v178, %v194
    %v211 = vxor.u32 %v179, %v195
    %v212 = vxor.u32 %v180, %v196
    %v213 = vxor.u32 %v181, %v197
    %v214 = vxor.u32 %v182, %v198
    %v215 = vxor.u32 %v183, %v199
    %v216 = vxor.u32 %v184, %v200
    %v217 = vxor.u32 %v185, %v201
    %v218 = vxor.u32 %v186, %v202
    %v219 = vxor.u32 %v187, %v203
    %v220 = vxor.u32 %v188, %v204
    %v221 = vxor.u32 %v189, %v205
    %v222 = vshrl.u32 %v206, 8
    %v223 = vshrl.u32 %v207, 8
    %v224 = vshrl.u32 %v208, 8
    %v225 = vshrl.u32 %v209, 8
    %v226 = vshrl.u32 %v210, 8
    %v227 = vshrl.u32 %v211, 8
    %v228 = vshrl.u32 %v212, 8
    %v229 = vshrl.u32 %v213, 8
    %v230 = vshrl.u32 %v214, 8
    %v231 = vshrl.u32 %v215, 8
    %v232 = vshrl.u32 %v216, 8
    %v233 = vshrl.u32 %v217, 8
    %v234 = vshrl.u32 %v218, 8
    %v235 = vshrl.u32 %v219, 8
    %v236 = vshrl.u32 %v220, 8
    %v237 = vshrl.u32 %v221, 8
    %v238 = vshrl.u32 %v222, 16
    %v239 = vand.u32 %v222, 65535
    %v240 = vcvt.s32.f32 %v238
    %v241 = vmul.f32 %v240, 65536.0
    %v242 = vcvt.s32.f32 %v239
    %v243 = vadd.f32 %v241, %v242
    %v244 = vshrl.u32 %v223, 16
    %v245 = vand.u32 %v223, 65535
    %v246 = vcvt.s32.f32 %v244
    %v247 = vmul.f32 %v246, 65536.0
    %v248 = vcvt.s32.f32 %v245
    %v249 = vadd.f32 %v247, %v248
    %v250 = vshrl.u32 %v224, 16
    %v251 = vand.u32 %v224, 65535
    %v252 = vcvt.s32.f32 %v250
    %v253 = vmul.f32 %v252, 65536.0
    %v254 = vcvt.s32.f32 %v251
    %v255 = vadd.f32 %v253, %v254
    %v256 = vshrl.u32 %v225, 16
    %v257 = vand.u32 %v225, 65535
    %v258 = vcvt.s32.f32 %v256
    %v259 = vmul.f32 %v258, 65536.0
    %v260 = vcvt.s32.f32 %v257
    %v261 = vadd.f32 %v259, %v260
    %v262 = vshrl.u32 %v226, 16
    %v263 = vand.u32 %v226, 65535
    %v264 = vcvt.s32.f32 %v262
    %v265 = vmul.f32 %v264, 65536.0
    %v266 = vcvt.s32.f32 %v263
    %v267 = vadd.f32 %v265, %v266
    %v268 = vshrl.u32 %v227, 16
    %v269 = vand.u32 %v227, 65535
    %v270 = vcvt.s32.f32 %v268
    %v271 = vmul.f32 %v270, 65536.0
    %v272 = vcvt.s32.f32 %v269
    %v273 = vadd.f32 %v271, %v272
    %v274 = vshrl.u32 %v228, 16
    %v275 = vand.u32 %v228, 65535
    %v276 = vcvt.s32.f32 %v274
    %v277 = vmul.f32 %v276, 65536.0
    %v278 = vcvt.s32.f32 %v275
    %v279 = vadd.f32 %v277, %v278
    %v280 = vshrl.u32 %v229, 16
    %v281 = vand.u32 %v229, 65535
    %v282 = vcvt.s32.f32 %v280
    %v283 = vmul.f32 %v282, 65536.0
    %v284 = vcvt.s32.f32 %v281
    %v285 = vadd.f32 %v283, %v284
    %v286 = vshrl.u32 %v230, 16
    %v287 = vand.u32 %v230, 65535
    %v288 = vcvt.s32.f32 %v286
    %v289 = vmul.f32 %v288, 65536.0
    %v290 = vcvt.s32.f32 %v287
    %v291 = vadd.f32 %v289, %v290
    %v292 = vshrl.u32 %v231, 16
    %v293 = vand.u32 %v231, 65535
    %v294 = vcvt.s32.f32 %v292
    %v295 = vmul.f32 %v294, 65536.0
    %v296 = vcvt.s32.f32 %v293
    %v297 = vadd.f32 %v295, %v296
    %v298 = vshrl.u32 %v232, 16
    %v299 = vand.u32 %v232, 65535
    %v300 = vcvt.s32.f32 %v298
    %v301 = vmul.f32 %v300, 65536.0
    %v302 = vcvt.s32.f32 %v299
    %v303 = vadd.f32 %v301, %v302
    %v304 = vshrl.u32 %v233, 16
    %v305 = vand.u32 %v233, 65535
    %v306 = vcvt.s32.f32 %v304
    %v307 = vmul.f32 %v306, 65536.0
    %v308 = vcvt.s32.f32 %v305
    %v309 = vadd.f32 %v307, %v308
    %v310 = vshrl.u32 %v234, 16
    %v311 = vand.u32 %v234, 65535
    %v312 = vcvt.s32.f32 %v310
    %v313 = vmul.f32 %v312, 65536.0
    %v314 = vcvt.s32.f32 %v311
    %v315 = vadd.f32 %v313, %v314
    %v316 = vshrl.u32 %v235, 16
    %v317 = vand.u32 %v235, 65535
    %v318 = vcvt.s32.f32 %v316
    %v319 = vmul.f32 %v318, 65536.0
    %v320 = vcvt.s32.f32 %v317
    %v321 = vadd.f32 %v319, %v320
    %v322 = vshrl.u32 %v236, 16
    %v323 = vand.u32 %v236, 65535
    %v324 = vcvt.s32.f32 %v322
    %v325 = vmul.f32 %v324, 65536.0
    %v326 = vcvt.s32.f32 %v323
    %v327 = vadd.f32 %v325, %v326
    %v328 = vshrl.u32 %v237, 16
    %v329 = vand.u32 %v237, 65535
    %v330 = vcvt.s32.f32 %v328
    %v331 = vmul.f32 %v330, 65536.0
    %v332 = vcvt.s32.f32 %v329
    %v333 = vadd.f32 %v331, %v332
    %v334 = vmul.f32 %v243, 5.9604645e-08
    %v335 = vmul.f32 %v249, 5.9604645e-08
    %v336 = vmul.f32 %v255, 5.9604645e-08
    %v337 = vmul.f32 %v261, 5.9604645e-08
    %v338 = vmul.f32 %v267, 5.9604645e-08
    %v339 = vmul.f32 %v273, 5.9604645e-08
    %v340 = vmul.f32 %v279, 5.9604645e-08
    %v341 = vmul.f32 %v285, 5.9604645e-08
    %v342 = vmul.f32 %v291, 5.9604645e-08
    %v343 = vmul.f32 %v297, 5.9604645e-08
    %v344 = vmul.f32 %v303, 5.9604645e-08
    %v345 = vmul.f32 %v309, 5.9604645e-08
    %v346 = vmul.f32 %v315, 5.9604645e-08
    %v347 = vmul.f32 %v321, 5.9604645e-08
    %v348 = vmul.f32 %v327, 5.9604645e-08
    %v349 = vmul.f32 %v333, 5.9604645e-08
    %v352 = vlaneseq
    %v353 = vshrl.u32 %v352, 7
    %v354 = vsub.s32 0, %v353
    %v355 = vrot.slane %v34, %v354
    %v356 = vlaneseq
    %v357 = vshrl.u32 %v356, 7
    %v358 = vsub.s32 1, %v357
    %v359 = vrot.slane %v34, %v358
    %v360 = vlaneseq
    %v361 = vshrl.u32 %v360, 7
    %v362 = vsub.s32 2, %v361
    %v363 = vrot.slane %v34, %v362
    %v364 = vlaneseq
    %v365 = vshrl.u32 %v364, 7
    %v366 = vsub.s32 3, %v365
    %v367 = vrot.slane %v34, %v366
    %v368 = vlaneseq
    %v369 = vshrl.u32 %v368, 7
    %v370 = vsub.s32 4, %v369
    %v371 = vrot.slane %v34, %v370
    %v372 = vlaneseq
    %v373 = vshrl.u32 %v372, 7
    %v374 = vsub.s32 5, %v373
    %v375 = vrot.slane %v34, %v374
    %v376 = vlaneseq
    %v377 = vshrl.u32 %v376, 7
    %v378 = vsub.s32 6, %v377
    %v379 = vrot.slane %v34, %v378
    %v380 = vlaneseq
    %v381 = vshrl.u32 %v380, 7
    %v382 = vsub.s32 7, %v381
    %v383 = vrot.slane %v34, %v382
    %v384 = vlaneseq
    %v385 = vshrl.u32 %v384, 7
    %v386 = vsub.s32 0, %v385
    %v387 = vrot.slane %v36, %v386
    %v388 = vlaneseq
    %v389 = vshrl.u32 %v388, 7
    %v390 = vsub.s32 1, %v389
    %v391 = vrot.slane %v36, %v390
    %v392 = vlaneseq
    %v393 = vshrl.u32 %v392, 7
    %v394 = vsub.s32 2, %v393
    %v395 = vrot.slane %v36, %v394
    %v396 = vlaneseq
    %v397 = vshrl.u32 %v396, 7
    %v398 = vsub.s32 3, %v397
    %v399 = vrot.slane %v36, %v398
    %v400 = vlaneseq
    %v401 = vshrl.u32 %v400, 7
    %v402 = vsub.s32 4, %v401
    %v403 = vrot.slane %v36, %v402
    %v404 = vlaneseq
    %v405 = vshrl.u32 %v404, 7
    %v406 = vsub.s32 5, %v405
    %v407 = vrot.slane %v36, %v406
    %v408 = vlaneseq
    %v409 = vshrl.u32 %v408, 7
    %v410 = vsub.s32 6, %v409
    %v411 = vrot.slane %v36, %v410
    %v412 = vlaneseq
    %v413 = vshrl.u32 %v412, 7
    %v414 = vsub.s32 7, %v413
    %v415 = vrot.slane %v36, %v414
    %vm432 = vcmp.lt.f32.partialorder %v334, %v355
    %vm433 = vcmp.lt.f32.partialorder %v335, %v359
    %vm434 = vcmp.lt.f32.partialorder %v336, %v363
    %vm435 = vcmp.lt.f32.partialorder %v337, %v367
    %vm436 = vcmp.lt.f32.partialorder %v338, %v371
    %vm437 = vcmp.lt.f32.partialorder %v339, %v375
    %vm438 = vcmp.lt.f32.partialorder %v340, %v379
    %vm439 = vcmp.lt.f32.partialorder %v341, %v383
    %vm440 = vcmp.lt.f32.partialorder %v342, %v387
    %vm441 = vcmp.lt.f32.partialorder %v343, %v391
    %vm442 = vcmp.lt.f32.partialorder %v344, %v395
    %vm443 = vcmp.lt.f32.partialorder %v345, %v399
    %vm444 = vcmp.lt.f32.partialorder %v346, %v403
    %vm445 = vcmp.lt.f32.partialorder %v347, %v407
    %vm446 = vcmp.lt.f32.partialorder %v348, %v411
    %vm447 = vcmp.lt.f32.partialorder %v349, %v415
    %v448 = vsel %vm432, 1.0, -1.0
    %v449 = vsel %vm433, 1.0, -1.0
    %v450 = vsel %vm434, 1.0, -1.0
    %v451 = vsel %vm435, 1.0, -1.0
    %v452 = vsel %vm436, 1.0, -1.0
    %v453 = vsel %vm437, 1.0, -1.0
    %v454 = vsel %vm438, 1.0, -1.0
    %v455 = vsel %vm439, 1.0, -1.0
    %v456 = vsel %vm440, 1.0, -1.0
    %v457 = vsel %vm441, 1.0, -1.0
    %v458 = vsel %vm442, 1.0, -1.0
    %v459 = vsel %vm443, 1.0, -1.0
    %v460 = vsel %vm444, 1.0, -1.0
    %v461 = vsel %vm445, 1.0, -1.0
    %v462 = vsel %vm446, 1.0, -1.0
    %v463 = vsel %vm447, 1.0, -1.0
    %v480 = vcombine.low %v448, %v449
    %v481 = vcombine.low %v450, %v451
    %v482 = vcombine.low %v452, %v453
    %v483 = vcombine.low %v454, %v455
    %v485 = vunpack.c.l.s4 1966171168
    %v486 = vunpack.c.0.s8 %v485
    %v487 = vlaneseq
    %v488 = vshrl.u32 %v487, 7
    %v489 = vsub.s32 %v486, %v488
    %v490 = vrot.slane %v480, %v489
    %v492 = vunpack.c.l.s4 1966171168
    %v493 = vunpack.c.0.s8 %v492
    %v494 = vlaneseq
    %v495 = vshrl.u32 %v494, 7
    %v496 = vsub.s32 %v493, %v495
    %v497 = vrot.slane %v481, %v496
    %v499 = vunpack.c.l.s4 1966171168
    %v500 = vunpack.c.0.s8 %v499
    %v501 = vlaneseq
    %v502 = vshrl.u32 %v501, 7
    %v503 = vsub.s32 %v500, %v502
    %v504 = vrot.slane %v482, %v503
    %v506 = vunpack.c.l.s4 1966171168
    %v507 = vunpack.c.0.s8 %v506
    %v508 = vlaneseq
    %v509 = vshrl.u32 %v508, 7
    %v510 = vsub.s32 %v507, %v509
    %v511 = vrot.slane %v483, %v510
    %v512 = vcombine.low %v490, %v497
    %v513 = vcombine.low %v504, %v511
    %v515 = vunpack.c.l.s4 1966171168
    %v516 = vunpack.c.0.s8 %v515
    %v517 = vlaneseq
    %v518 = vshrl.u32 %v517, 7
    %v519 = vsub.s32 %v516, %v518
    %v520 = vrot.slane %v512, %v519
    %v522 = vunpack.c.l.s4 1966171168
    %v523 = vunpack.c.0.s8 %v522
    %v524 = vlaneseq
    %v525 = vshrl.u32 %v524, 7
    %v526 = vsub.s32 %v523, %v525
    %v527 = vrot.slane %v513, %v526
    %v528 = vcombine.low %v520, %v527
    %v529 = vcombine.low %v456, %v457
    %v530 = vcombine.low %v458, %v459
    %v531 = vcombine.low %v460, %v461
    %v532 = vcombine.low %v462, %v463
    %v534 = vunpack.c.l.s4 1966171168
    %v535 = vunpack.c.0.s8 %v534
    %v536 = vlaneseq
    %v537 = vshrl.u32 %v536, 7
    %v538 = vsub.s32 %v535, %v537
    %v539 = vrot.slane %v529, %v538
    %v541 = vunpack.c.l.s4 1966171168
    %v542 = vunpack.c.0.s8 %v541
    %v543 = vlaneseq
    %v544 = vshrl.u32 %v543, 7
    %v545 = vsub.s32 %v542, %v544
    %v546 = vrot.slane %v530, %v545
    %v548 = vunpack.c.l.s4 1966171168
    %v549 = vunpack.c.0.s8 %v548
    %v550 = vlaneseq
    %v551 = vshrl.u32 %v550, 7
    %v552 = vsub.s32 %v549, %v551
    %v553 = vrot.slane %v531, %v552
    %v555 = vunpack.c.l.s4 1966171168
    %v556 = vunpack.c.0.s8 %v555
    %v557 = vlaneseq
    %v558 = vshrl.u32 %v557, 7
    %v559 = vsub.s32 %v556, %v558
    %v560 = vrot.slane %v532, %v559
    %v561 = vcombine.low %v539, %v546
    %v562 = vcombine.low %v553, %v560
    %v564 = vunpack.c.l.s4 1966171168
    %v565 = vunpack.c.0.s8 %v564
    %v566 = vlaneseq
    %v567 = vshrl.u32 %v566, 7
    %v568 = vsub.s32 %v565, %v567
    %v569 = vrot.slane %v561, %v568
    %v571 = vunpack.c.l.s4 1966171168
    %v572 = vunpack.c.0.s8 %v571
    %v573 = vlaneseq
    %v574 = vshrl.u32 %v573, 7
    %v575 = vsub.s32 %v572, %v574
    %v576 = vrot.slane %v562, %v575
    %v577 = vcombine.low %v569, %v576
    %580 = vst [vmem:[#allocation7] sm:$0xff] %v528
    %581 = vst [vmem:[#allocation7 + $0x8] sm:$0xff] %v577
    // Predicated region
    $region10: #{tpu_custom_call.1} parent=1 // pred_check
      _
    $region11: #{tpu_custom_call.1} parent=1 // pred_check_branch
      %583 = sbr.rel (0) target = $region13
    $region12: #{tpu_custom_call.1} parent=1 // pred_region
      %s585 = ssub.s32 256, 256
      %586 = vsyncadd [#allocation6], %s585
      %s588 = sshll.u32 [#allocation7], 4
      %s589 = int_to_ptr.vmem [resolvable:$true] %s588
      %591 = dma.vmem_to_hbm [thread:$0]  %s589, 256, %s2, [#allocation6]
    $region13: #{tpu_custom_call.1} parent=1 // pred_fallthru
      _
    // Predicated region
    $region14: #{tpu_custom_call.1} parent=1 // pred_check
      _
    $region15: #{tpu_custom_call.1} parent=1 // pred_check_branch
      %593 = sbr.rel (0) target = $region17
    $region16: #{tpu_custom_call.1} parent=1 // pred_region
      %594 = dma.done [#allocation6], 256
    $region17: #{tpu_custom_call.1} parent=1 // pred_fallthru
      _
    %595 = vsyncpa [#allocation5], 1
    %596 = vsyncpa [#allocation6], 1

</llo_original>
